<compile_context>
chip_gen: v6e
topology: v6e:2x2x1
jax: 0.10.0
libtpu: 0.0.40
codegen_flags: <defaults>
</compile_context>

<pallas_src>
import jax
import jax.numpy as jnp
import numpy as np
from jax.experimental import pallas as pl
from jax.experimental.pallas import tpu as pltpu

LANE = 128                      # lane width: pad feature (last) dims to this
SUBLANE = 8                     # sublane width: pad small row dims to this
_VMEM_CAP = 48 * 1024 * 1024    # never request more than this (v7x-safe)
_VMEM_FLOOR = 16 * 1024 * 1024


# ---------------------------------------------------------------------------
# Padding / tiling helpers
# ---------------------------------------------------------------------------
def _round_up(n, m):
    return ((n + m - 1) // m) * m


def _pick_tile(n_pad, target):
    """Largest multiple of 128 that is <= target and divides n_pad."""
    t = max(min(target, n_pad), LANE)
    t = (t // LANE) * LANE
    while n_pad % t != 0:
        t -= LANE
    return t


def _pad2(x, rows, cols):
    return jnp.pad(x, ((0, rows - x.shape[0]), (0, cols - x.shape[1])))


def _vmem_request(nbytes):
    """Actual working set * 1.5 + 4 MiB slack, clamped to a v7x-safe range."""
    return int(min(max(int(1.5 * nbytes) + (4 << 20), _VMEM_FLOOR), _VMEM_CAP))


def _conv_vmem_bytes(n_pad, f_in, f_out, tm, tk, fused_proj):
    bf16 = 2
    b = 2 * tm * tk * bf16            # double-buffered A_hat tiles
    b += 2 * n_pad * f_in * bf16      # resident XW (budget 2 buffers, conservative)
    b += 2 * f_in * 4                 # bias
    if fused_proj:
        b += 2 * f_in * f_out * bf16  # resident next-layer weight
    b += 2 * tm * f_out * bf16        # double-buffered output tiles
    b += tm * f_in * 4                # f32 accumulator scratch
    return b


# ---------------------------------------------------------------------------
# Kernel 1: one GCNConv layer   H = relu(A_hat @ XW + b)
#   XW (= X @ W, hoisted out of the grid) is VMEM-resident; only A_hat streams.
#   Optional fused next-layer projection: out = relu(A_hat @ XW + b) @ W_next
# ---------------------------------------------------------------------------
def _conv_kernel(a_ref, xw_ref, b_ref, o_ref, acc_ref):
    k = pl.program_id(1)
    tk = a_ref.shape[1]

    @pl.when(k == 0)
    def _():
        acc_ref[...] = jnp.zeros_like(acc_ref)

    off = pl.multiple_of(k * tk, LANE)
    acc_ref[...] += jnp.dot(a_ref[...], xw_ref[pl.ds(off, tk), :],
                            preferred_element_type=jnp.float32)

    @pl.when(k == pl.num_programs(1) - 1)
    def _():
        o_ref[...] = jnp.maximum(acc_ref[...] + b_ref[...],
                                 0.0).astype(o_ref.dtype)


def _conv_proj_kernel(a_ref, xw_ref, b_ref, wn_ref, o_ref, acc_ref):
    k = pl.program_id(1)
    tk = a_ref.shape[1]

    @pl.when(k == 0)
    def _():
        acc_ref[...] = jnp.zeros_like(acc_ref)

    off = pl.multiple_of(k * tk, LANE)
    acc_ref[...] += jnp.dot(a_ref[...], xw_ref[pl.ds(off, tk), :],
                            preferred_element_type=jnp.float32)

    # Finalize: bias + ReLU, then immediately project by the NEXT layer's
    # weight so H never round-trips through HBM.
    @pl.when(k == pl.num_programs(1) - 1)
    def _():
        h = jnp.maximum(acc_ref[...] + b_ref[...], 0.0).astype(wn_ref.dtype)
        o_ref[...] = jnp.dot(h, wn_ref[...],
                             preferred_element_type=jnp.float32).astype(o_ref.dtype)


def gcn_conv(a_hat, xw, b, *, tile_m, tile_k, w_next=None):
    n_pad = a_hat.shape[0]
    f_in = xw.shape[1]
    f_out = f_in if w_next is None else w_next.shape[1]
    grid = (n_pad // tile_m, n_pad // tile_k)

    in_specs = [
        pl.BlockSpec((tile_m, tile_k), lambda i, k: (i, k)),   # A_hat tile (streamed)
        pl.BlockSpec((n_pad, f_in), lambda i, k: (0, 0)),      # XW (VMEM-resident)
        pl.BlockSpec((1, f_in), lambda i, k: (0, 0)),          # bias (resident)
    ]
    operands = [a_hat, xw, b]
    kernel = _conv_kernel
    if w_next is not None:
        in_specs.append(pl.BlockSpec((f_in, f_out), lambda i, k: (0, 0)))  # W_next
        operands.append(w_next)
        kernel = _conv_proj_kernel

    vmem = _vmem_request(
        _conv_vmem_bytes(n_pad, f_in, f_out, tile_m, tile_k, w_next is not None))

    return pl.pallas_call(
        kernel,
        out_shape=jax.ShapeDtypeStruct((n_pad, f_out), jnp.bfloat16),
        grid_spec=pltpu.PrefetchScalarGridSpec(
            num_scalar_prefetch=0,
            grid=grid,
            in_specs=in_specs,
            out_specs=pl.BlockSpec((tile_m, f_out), lambda i, k: (i, 0)),
            scratch_shapes=[pltpu.VMEM((tile_m, f_in), jnp.float32)],
        ),
        compiler_params=pltpu.CompilerParams(
            dimension_semantics=("parallel", "arbitrary"),
            vmem_limit_bytes=vmem,
        ),
    )(*operands)


# ---------------------------------------------------------------------------
# Kernel 2: mean pool + FFN Linear   out = (P @ H) @ Wf + bf
#   P and H are bf16 (MXU), accumulation in f32; tiny final Linear stays f32.
# ---------------------------------------------------------------------------
def _pool_ffn_kernel(p_ref, h_ref, wf_ref, bf_ref, o_ref, acc_ref):
    k = pl.program_id(0)

    @pl.when(k == 0)
    def _():
        acc_ref[...] = jnp.zeros_like(acc_ref)

    acc_ref[...] += jnp.dot(p_ref[...], h_ref[...],
                            preferred_element_type=jnp.float32)

    @pl.when(k == pl.num_programs(0) - 1)
    def _():
        o_ref[...] = (jnp.dot(acc_ref[...], wf_ref[...],
                              preferred_element_type=jnp.float32)
                      + bf_ref[...])


def pool_ffn(pool_mat, h, wf, bf, *, tile_k):
    g_pad, n_pad = pool_mat.shape
    h_dim = h.shape[1]
    o_dim = wf.shape[1]
    grid = (n_pad // tile_k,)

    vmem = _vmem_request(
        2 * g_pad * tile_k * 2 + 2 * tile_k * h_dim * 2
        + h_dim * o_dim * 4 + g_pad * h_dim * 4 + g_pad * o_dim * 4)

    return pl.pallas_call(
        _pool_ffn_kernel,
        out_shape=jax.ShapeDtypeStruct((g_pad, o_dim), jnp.float32),
        grid_spec=pltpu.PrefetchScalarGridSpec(
            num_scalar_prefetch=0,
            grid=grid,
            in_specs=[
                pl.BlockSpec((g_pad, tile_k), lambda k: (0, k)),   # P columns tile
                pl.BlockSpec((tile_k, h_dim), lambda k: (k, 0)),   # H row tile
                pl.BlockSpec((h_dim, o_dim), lambda k: (0, 0)),    # Wf (resident)
                pl.BlockSpec((1, o_dim), lambda k: (0, 0)),        # bf
            ],
            out_specs=pl.BlockSpec((g_pad, o_dim), lambda k: (0, 0)),
            scratch_shapes=[pltpu.VMEM((g_pad, h_dim), jnp.float32)],
        ),
        compiler_params=pltpu.CompilerParams(
            dimension_semantics=("arbitrary",),
            vmem_limit_bytes=vmem,
        ),
    )(pool_mat, h, wf, bf)


# ---------------------------------------------------------------------------
# Full forward (padding + dtype plumbing around the kernels)
# ---------------------------------------------------------------------------
def gcn_forward(a_hat, pool_mat, x, params, *, tile_m=512, tile_k=1024):
    w1, b1, w2, b2, wf, bf = params
    num_graphs = pool_mat.shape[0]
    num_nodes = x.shape[0]
    out_neurons = wf.shape[1]

    n_pad = _round_up(max(num_nodes, LANE), LANE)
    f_hid = _round_up(max(w1.shape[1], LANE), LANE)
    f_out = _round_up(max(out_neurons, LANE), LANE)
    g_pad = _round_up(max(num_graphs, SUBLANE), SUBLANE)

    # Keep grid dim 0 >= 2 where possible so both v7x TensorCores get work.
    tm_target = min(tile_m, n_pad // 2) if n_pad >= 2 * LANE else n_pad
    tm = _pick_tile(n_pad, tm_target)
    tk = _pick_tile(n_pad, tile_k)

    cdt = jnp.bfloat16  # MXU input dtype (f32 accumulation inside the kernels)
    # TODO(synk): for v7x/v6e at very large N, quantize A_hat to fp8/int8 with a
    # scale applied in the k==last epilogue, and stream XW in tiles once the
    # resident-XW block no longer fits v7x's 64 MiB VMEM (N >~ 100K).

    # Layer-1 projection at REAL sizes (8 -> 32): no zero-padded feature lanes
    # are streamed or matmul'ed; only the small result is padded to 128 lanes.
    xw1 = jnp.dot(x, w1, preferred_element_type=jnp.float32)
    xw1_p = _pad2(xw1, n_pad, f_hid).astype(cdt)

    a_p = _pad2(a_hat, n_pad, n_pad).astype(cdt)
    b1_p = _pad2(b1, 1, f_hid).astype(jnp.float32)
    w2_p = _pad2(w2, f_hid, f_hid).astype(cdt)
    b2_p = _pad2(b2, 1, f_hid).astype(jnp.float32)
    wf_p = _pad2(wf, f_hid, f_out).astype(jnp.float32)
    bf_p = _pad2(bf, 1, f_out).astype(jnp.float32)
    p_p = _pad2(pool_mat, g_pad, n_pad).astype(cdt)

    # conv1, with layer-2's projection fused into the epilogue:
    #   xw2 = relu(A_hat @ XW1 + b1) @ W2
    xw2 = gcn_conv(a_p, xw1_p, b1_p, tile_m=tm, tile_k=tk, w_next=w2_p)
    # conv2: H2 = relu(A_hat @ XW2 + b2)
    h2 = gcn_conv(a_p, xw2, b2_p, tile_m=tm, tile_k=tk)
    # TODO(synk): training-mode dropout (RNG masking) not implemented; this
    # reproduces eval/inference semantics where Dropout is the identity.
    out = pool_ffn(p_p, h2, wf_p, bf_p, tile_k=tk)   # mean pool + Linear
    return out[:num_graphs, :out_neurons]


# ---------------------------------------------------------------------------
# Glue: dense normalized adjacency + mean-pooling matrix (plain JAX)
# ---------------------------------------------------------------------------
def build_norm_adj(edge_index, num_nodes):
    """A_hat = D^-1/2 (A + I) D^-1/2, messages flowing src -> dst."""
    src, dst = edge_index[0], edge_index[1]
    a = jnp.zeros((num_nodes, num_nodes), jnp.float32)
    a = a.at[dst, src].add(1.0)
    diag = jnp.diagonal(a)
    a = a + jnp.diag(jnp.where(diag == 0.0, 1.0, 0.0))
    deg = jnp.sum(a, axis=1)
    dinv = jax.lax.rsqrt(jnp.maximum(deg, 1e-12))
    return dinv[:, None] * a * dinv[None, :]


def build_mean_pool(batch, num_graphs):
    """P[g, n] = 1/|graph g| if node n belongs to graph g else 0."""
    onehot = (batch[None, :] == jnp.arange(num_graphs)[:, None]).astype(jnp.float32)
    counts = jnp.maximum(jnp.sum(onehot, axis=1, keepdims=True), 1.0)
    return onehot / counts


def init_params(key, in_channels, gnn_dim, out_neurons):
    k1, k2, k3 = jax.random.split(key, 3)

    def glorot(k, fan_in, fan_out):
        s = jnp.sqrt(6.0 / (fan_in + fan_out))
        return jax.random.uniform(k, (fan_in, fan_out), jnp.float32, -s, s)

    w1 = glorot(k1, in_channels, gnn_dim)
    b1 = jnp.zeros((1, gnn_dim), jnp.float32)
    w2 = glorot(k2, gnn_dim, gnn_dim)
    b2 = jnp.zeros((1, gnn_dim), jnp.float32)
    wf = glorot(k3, gnn_dim, out_neurons)
    bf = jnp.zeros((1, out_neurons), jnp.float32)
    return (w1, b1, w2, b2, wf, bf)


def reference_forward(a_hat, pool_mat, x, params):
    w1, b1, w2, b2, wf, bf = params
    h = jnp.maximum(a_hat @ (x @ w1) + b1, 0.0)
    h = jnp.maximum(a_hat @ (h @ w2) + b2, 0.0)
    return (pool_mat @ h) @ wf + bf


if __name__ == "__main__":
    # Small synthetic graph batch: 2 ring graphs of 80 nodes each (160 nodes
    # total -> padded node dim 256 so the 128-tile grid/accumulator path is
    # actually exercised at toy size).
    nodes_per_graph = 80
    num_graphs = 2
    num_nodes = num_graphs * nodes_per_graph
    in_channels = 8
    gnn_dim = 32
    out_neurons = 4

    key = jax.random.PRNGKey(0)
    kx, kp = jax.random.split(key)

    x = jax.random.normal(kx, (num_nodes, in_channels), jnp.float32)

    # Undirected rings (both edge directions listed).
    edges = []
    for g in range(num_graphs):
        base = g * nodes_per_graph
        for i in range(nodes_per_graph):
            a, b = base + i, base + (i + 1) % nodes_per_graph
            edges.append((a, b))
            edges.append((b, a))
    edge_index = jnp.asarray(np.array(edges, dtype=np.int32).T)   # [2, E]
    batch = jnp.asarray(
        np.repeat(np.arange(num_graphs), nodes_per_graph).astype(np.int32))

    a_hat = build_norm_adj(edge_index, num_nodes)
    pool_mat = build_mean_pool(batch, num_graphs)
    params = init_params(kp, in_channels, gnn_dim, out_neurons)

    # Small tile targets here so the toy case runs a (2, 2) grid; production
    # defaults are tile_m=512, tile_k=1024.
    out = gcn_forward(a_hat, pool_mat, x, params, tile_m=128, tile_k=128)
    out = jax.block_until_ready(out)

    ref = reference_forward(a_hat, pool_mat, x, params)
    np.testing.assert_allclose(np.asarray(out), np.asarray(ref),
                               rtol=2e-2, atol=2e-2)
    print("KERNEL_OK")
</pallas_src>

<mosaic_0001>
module attributes {stable_mosaic.version = 11 : i64} {
  func.func @_conv_proj_kernel(%arg0: i32, %arg1: i32, %arg2: memref<128x128xbf16, #tpu.memory_space<vmem>>, %arg3: memref<256x128xbf16, #tpu.memory_space<vmem>>, %arg4: memref<1x128xf32, #tpu.memory_space<vmem>>, %arg5: memref<128x128xbf16, #tpu.memory_space<vmem>>, %arg6: memref<128x128xbf16, #tpu.memory_space<vmem>>, %arg7: memref<128x128xf32, #tpu.memory_space<vmem>>) attributes {dimension_semantics = [#tpu.dimension_semantics<parallel>, #tpu.dimension_semantics<arbitrary>], iteration_bounds = array<i64: 2, 2>, scalar_prefetch = 0 : i64, scratch_operands = 1 : i64, tpu.core_type = #tpu.core_type<tc>, window_params = [{transform_indices = @transform_0, window_bounds = array<i64: 128, 128>}, {pipeline_mode = #tpu.pipeline_mode<synchronous>, transform_indices = @transform_1, window_bounds = array<i64: 256, 128>}, {pipeline_mode = #tpu.pipeline_mode<synchronous>, transform_indices = @transform_2, window_bounds = array<i64: 1, 128>}, {pipeline_mode = #tpu.pipeline_mode<synchronous>, transform_indices = @transform_3, window_bounds = array<i64: 128, 128>}, {transform_indices = @transform_4, window_bounds = array<i64: 128, 128>}]} {
    %c0_i32 = arith.constant 0 : i32
    %0 = arith.cmpi eq, %arg1, %c0_i32 : i32
    %1 = arith.extui %0 : i1 to i32
    %c0_i32_0 = arith.constant 0 : i32
    %2 = arith.cmpi ne, %1, %c0_i32_0 : i32
    scf.if %2 {
      %cst_8 = arith.constant 0.000000e+00 : f32
      %15 = vector.broadcast %cst_8 : f32 to vector<128x128xf32>
      %c0_9 = arith.constant 0 : index
      %c0_10 = arith.constant 0 : index
      %16 = vector.load %arg7[%c0_9, %c0_10] : memref<128x128xf32, #tpu.memory_space<vmem>>, vector<128x128xf32>
      tpu.vector_store %arg7[%c0_9, %c0_10], %15 {strides = array<i32>} : memref<128x128xf32, #tpu.memory_space<vmem>>, vector<128x128xf32>,
    } else {
    }
    %c128_i32 = arith.constant 128 : i32
    %3 = arith.muli %arg1, %c128_i32 : i32
    %4 = tpu.assume_multiple %3, 128 : i32
    %c0 = arith.constant 0 : index
    %c0_1 = arith.constant 0 : index
    %5 = vector.load %arg7[%c0, %c0_1] : memref<128x128xf32, #tpu.memory_space<vmem>>, vector<128x128xf32>
    %c0_2 = arith.constant 0 : index
    %c0_3 = arith.constant 0 : index
    %6 = vector.load %arg2[%c0_2, %c0_3] : memref<128x128xbf16, #tpu.memory_space<vmem>>, vector<128x128xbf16>
    %7 = arith.index_cast %4 : i32 to index
    %c0_4 = arith.constant 0 : index
    %8 = vector.load %arg3[%7, %c0_4] : memref<256x128xbf16, #tpu.memory_space<vmem>>, vector<128x128xbf16>
    %cst = arith.constant dense<0.000000e+00> : vector<128x128xf32>
    %9 = tpu.matmul %6, %8, %cst {dimension_numbers = #tpu.dot_dimension_numbers<[1], [0], [0], [1], [0, 0, 1, 1], [], []>} : vector<128x128xbf16>, vector<128x128xbf16>, vector<128x128xf32> -> vector<128x128xf32>
    %10 = arith.addf %5, %9 : vector<128x128xf32>
    %c0_5 = arith.constant 0 : index
    %c0_6 = arith.constant 0 : index
    %11 = vector.load %arg7[%c0_5, %c0_6] : memref<128x128xf32, #tpu.memory_space<vmem>>, vector<128x128xf32>
    tpu.vector_store %arg7[%c0_5, %c0_6], %10 {strides = array<i32>} : memref<128x128xf32, #tpu.memory_space<vmem>>, vector<128x128xf32>,
    %c1_i32 = arith.constant 1 : i32
    %12 = arith.cmpi eq, %arg1, %c1_i32 : i32
    %13 = arith.extui %12 : i1 to i32
    %c0_i32_7 = arith.constant 0 : i32
    %14 = arith.cmpi ne, %13, %c0_i32_7 : i32
    scf.if %14 {
      %c0_8 = arith.constant 0 : index
      %c0_9 = arith.constant 0 : index
      %15 = vector.load %arg7[%c0_8, %c0_9] : memref<128x128xf32, #tpu.memory_space<vmem>>, vector<128x128xf32>
      %c0_10 = arith.constant 0 : index
      %c0_11 = arith.constant 0 : index
      %16 = vector.load %arg4[%c0_10, %c0_11] : memref<1x128xf32, #tpu.memory_space<vmem>>, vector<1x128xf32>
      %17 = vector.broadcast %16 : vector<1x128xf32> to vector<128x128xf32>
      %18 = arith.addf %15, %17 : vector<128x128xf32>
      %cst_12 = arith.constant 0.000000e+00 : f32
      %19 = vector.broadcast %cst_12 : f32 to vector<128x128xf32>
      %20 = arith.maximumf %18, %19 : vector<128x128xf32>
      %21 = arith.truncf %20 : vector<128x128xf32> to vector<128x128xbf16>
      %c0_13 = arith.constant 0 : index
      %c0_14 = arith.constant 0 : index
      %22 = vector.load %arg5[%c0_13, %c0_14] : memref<128x128xbf16, #tpu.memory_space<vmem>>, vector<128x128xbf16>
      %cst_15 = arith.constant dense<0.000000e+00> : vector<128x128xf32>
      %23 = tpu.matmul %21, %22, %cst_15 {dimension_numbers = #tpu.dot_dimension_numbers<[1], [0], [0], [1], [0, 0, 1, 1], [], []>} : vector<128x128xbf16>, vector<128x128xbf16>, vector<128x128xf32> -> vector<128x128xf32>
      %24 = arith.truncf %23 : vector<128x128xf32> to vector<128x128xbf16>
      %c0_16 = arith.constant 0 : index
      %c0_17 = arith.constant 0 : index
      %25 = vector.load %arg6[%c0_16, %c0_17] : memref<128x128xbf16, #tpu.memory_space<vmem>>, vector<128x128xbf16>
      tpu.vector_store %arg6[%c0_16, %c0_17], %24 {strides = array<i32>} : memref<128x128xbf16, #tpu.memory_space<vmem>>, vector<128x128xbf16>,
    } else {
    }
    return
  }
  func.func @transform_0(%arg0: i32, %arg1: i32) -> (i32, i32) {
    %c0_i32 = arith.constant 0 : i32
    return %arg0, %arg1 : i32, i32
  }
  func.func @transform_1(%arg0: i32, %arg1: i32) -> (i32, i32) {
    %c0_i32 = arith.constant 0 : i32
    %c0_i32_0 = arith.constant 0 : i32
    %c0_i32_1 = arith.constant 0 : i32
    return %c0_i32, %c0_i32_0 : i32, i32
  }
  func.func @transform_2(%arg0: i32, %arg1: i32) -> (i32, i32) {
    %c0_i32 = arith.constant 0 : i32
    %c0_i32_0 = arith.constant 0 : i32
    %c0_i32_1 = arith.constant 0 : i32
    return %c0_i32, %c0_i32_0 : i32, i32
  }
  func.func @transform_3(%arg0: i32, %arg1: i32) -> (i32, i32) {
    %c0_i32 = arith.constant 0 : i32
    %c0_i32_0 = arith.constant 0 : i32
    %c0_i32_1 = arith.constant 0 : i32
    return %c0_i32, %c0_i32_0 : i32, i32
  }
  func.func @transform_4(%arg0: i32, %arg1: i32) -> (i32, i32) {
    %c0_i32 = arith.constant 0 : i32
    %c0_i32_0 = arith.constant 0 : i32
    return %arg0, %c0_i32 : i32, i32
  }
}

</mosaic_0001>

<llo_original>
// kernel: tpu_custom_call.1
$region0: #{tpu_custom_call.1}
  #allocation0 [shape = 'u32[]', space=smem, size = 0x4, offset = 0x4, fixed_abs, tag = 'smem constant byte address 0x4 - core index']
  #allocation1 [shape = 'u32[144,128]{1,0:T(1,128)}', space=vmem, size = 0x12000, scoped, tag = 'internal scratch']
  #allocation2 [shape = 'f32[128,128]{1,0:T(8,128)}', space=vmem, size = 0x10000, scoped, tag = 'scratch operand']
  %s0 = inlined_call_operand.hbm [shape: bf16[256,256], index: 0, kind: input, shape index: {}]
  %s1 = inlined_call_operand.hbm [shape: bf16[256,128], index: 1, kind: input, shape index: {}]
  %s2 = inlined_call_operand.vmem [shape: f32[1,128], index: 2, kind: input, shape index: {}]
  %s3 = inlined_call_operand.hbm [shape: bf16[128,128], index: 3, kind: input, shape index: {}]
  %s4 = inlined_call_operand.hbm [shape: bf16[256,128], index: 4, kind: output, shape index: {}]
  %s5 = sld [smem:[#allocation0]]
  $region69: #{tpu_custom_call.1} parent=0
    _
  %s7 = ssub.s32 1, %s5
  %s8 = scalar_select 0, %s7, %s5
  $region1: #{tpu_custom_call.1} parent=0
    #allocation3 [shape = 'u8[65536]{0}', space=vmem, size = 0x10000, scoped, tag = 'input window, operand 0']
    #allocation4 [shape = 's32[2]{0}', space=sflag, size = 0x8, scoped, tag = 'scoped memory for tpu_custom_call.1']
    #allocation5 [shape = 's32[2]{0}', space=sflag, size = 0x8, scoped, tag = 'scoped memory for tpu_custom_call.1']
    #allocation6 [shape = 'u8[65536]{0}', space=vmem, size = 0x10000, scoped, tag = 'input window, operand 1, single buffered']
    #allocation7 [shape = 's32[1]{0}', space=sflag, size = 0x4, scoped, tag = 'scoped memory for tpu_custom_call.1']
    #allocation8 [shape = 'u8[32768]{0}', space=vmem, size = 0x8000, scoped, tag = 'input window, operand 3, single buffered']
    #allocation9 [shape = 'u8[65536]{0}', space=vmem, size = 0x10000, scoped, tag = 'output window, operand 0']
    %9 = vsyncpa [#allocation4], 0
    %s10 = scalar_lea.sflag [#allocation4], 1
    %11 = vsyncpa %s10, 0
    %12 = vsyncpa [#allocation7], 0
    %13 = vsyncpa [#allocation5], 0
    %s14 = scalar_lea.sflag [#allocation5], 1
    %15 = vsyncpa %s14, 0
    loop: start=0, step=1, limit=6
    $region2: #{tpu_custom_call.1} parent=1 // loop_pre_header
      _
    $region3: #{tpu_custom_call.1} parent=1 // loop_header
      %s17 = sphi 0, %s21
      %p18 = scmp.ge.s32.totalorder %s17, 6
      %s24 = sphi 0, %s36
      %s25 = sphi 0, %s32
      %s26 = sphi 0, %s24
      %s27 = sphi 0, %s25
      %s28 = sphi 0, %s26
      %s29 = sphi 0, %s27
      %s41 = sphi 0, %s43
      %s44 = sphi 0, %s41
      %s45 = sphi 0, %s44
      %s61 = sphi 0, %s45
      %s65 = sphi 0, %s65
      %s67 = sphi 0, %s65
      %s68 = sphi 0, %s67
      %s82 = sphi 0, %s68
      %s86 = sphi 0, %s86
      %s88 = sphi 0, %s86
      %s89 = sphi 0, %s88
      %s103 = sphi 0, %s89
      %s107 = sphi 0, %s107
      %s109 = sphi 0, %s107
      %s110 = sphi 0, %s109
      %s124 = sphi 0, %s110
      %s130 = sphi 0, %s132
      %s133 = sphi 0, %s130
      %s134 = sphi 0, %s133
      %s150 = sphi 0, %s134
    $region4: #{tpu_custom_call.1} parent=1 // loop_header_branch
      %20 = sbr.rel (%p18) target = $region8
    $region5: #{tpu_custom_call.1} parent=1 // loop_body
      %s22 = ssub.s32 %s17, 1
      %s23 = ssub.s32 %s17, 2
      %s30 = sadd.s32 1, %s25
      %p31 = scmp.ge.s32.totalorder %s30, 2
      %s32 = scalar_select %p31, 0, %s30
      %s33 = sadd.s32 1, %s24
      %s34 = scalar_select %p31, %s33, %s24
      %p35 = scmp.ge.s32.totalorder %s34, 2
      %s36 = scalar_select %p35, 0, %s34
      %s37 = ssub.s32 %s24, %s36
      %s38 = ssub.s32 %s25, %s32
      %s39 = sor.u32 %s37, %s38
      %p40 = scmp.eq.s32.totalorder %s39, 0
      %s42 = sadd.s32 %s41, 1
      %s43 = scalar_select %p40, %s41, %s42
      %p46 = pneg %p40
      %p47 = scmp.eq.s32.totalorder %s17, 3
      %p48 = por %p46, %p47
      %p49 = scmp.ne.s32.totalorder %s41, %s44
      %p50 = scmp.eq.s32.totalorder %s17, 0
      %p51 = por %p49, %p50
      %p52 = scmp.ne.s32.totalorder %s41, %s44
      %p53 = scmp.eq.s32.totalorder %s22, 3
      %p54 = por %p52, %p53
      %p55 = scmp.ne.s32.totalorder %s44, %s45
      %p56 = scmp.eq.s32.totalorder %s22, 0
      %p57 = por %p55, %p56
      %p58 = scmp.ne.s32.totalorder %s44, %s45
      %p59 = scmp.eq.s32.totalorder %s23, 3
      %p60 = por %p58, %p59
      %p62 = scmp.ne.s32.totalorder %s45, %s61
      %p63 = scmp.eq.s32.totalorder %s23, 0
      %p64 = por %p62, %p63
      %s66 = sadd.s32 %s65, 1
      %p69 = scmp.eq.s32.totalorder %s17, 3
      %p70 = scmp.ne.s32.totalorder %s65, %s67
      %p71 = scmp.eq.s32.totalorder %s17, 0
      %p72 = por %p70, %p71
      %p73 = scmp.ne.s32.totalorder %s65, %s67
      %p74 = scmp.eq.s32.totalorder %s22, 3
      %p75 = por %p73, %p74
      %p76 = scmp.ne.s32.totalorder %s67, %s68
      %p77 = scmp.eq.s32.totalorder %s22, 0
      %p78 = por %p76, %p77
      %p79 = scmp.ne.s32.totalorder %s67, %s68
      %p80 = scmp.eq.s32.totalorder %s23, 3
      %p81 = por %p79, %p80
      %p83 = scmp.ne.s32.totalorder %s68, %s82
      %p84 = scmp.eq.s32.totalorder %s23, 0
      %p85 = por %p83, %p84
      %s87 = sadd.s32 %s86, 1
      %p90 = scmp.eq.s32.totalorder %s17, 3
      %p91 = scmp.ne.s32.totalorder %s86, %s88
      %p92 = scmp.eq.s32.totalorder %s17, 0
      %p93 = por %p91, %p92
      %p94 = scmp.ne.s32.totalorder %s86, %s88
      %p95 = scmp.eq.s32.totalorder %s22, 3
      %p96 = por %p94, %p95
      %p97 = scmp.ne.s32.totalorder %s88, %s89
      %p98 = scmp.eq.s32.totalorder %s22, 0
      %p99 = por %p97, %p98
      %p100 = scmp.ne.s32.totalorder %s88, %s89
      %p101 = scmp.eq.s32.totalorder %s23, 3
      %p102 = por %p100, %p101
      %p104 = scmp.ne.s32.totalorder %s89, %s103
      %p105 = scmp.eq.s32.totalorder %s23, 0
      %p106 = por %p104, %p105
      %s108 = sadd.s32 %s107, 1
      %p111 = scmp.eq.s32.totalorder %s17, 3
      %p112 = scmp.ne.s32.totalorder %s107, %s109
      %p113 = scmp.eq.s32.totalorder %s17, 0
      %p114 = por %p112, %p113
      %p115 = scmp.ne.s32.totalorder %s107, %s109
      %p116 = scmp.eq.s32.totalorder %s22, 3
      %p117 = por %p115, %p116
      %p118 = scmp.ne.s32.totalorder %s109, %s110
      %p119 = scmp.eq.s32.totalorder %s22, 0
      %p120 = por %p118, %p119
      %p121 = scmp.ne.s32.totalorder %s109, %s110
      %p122 = scmp.eq.s32.totalorder %s23, 3
      %p123 = por %p121, %p122
      %p125 = scmp.ne.s32.totalorder %s110, %s124
      %p126 = scmp.eq.s32.totalorder %s23, 0
      %p127 = por %p125, %p126
      %s128 = ssub.s32 %s24, %s36
      %p129 = scmp.eq.s32.totalorder %s128, 0
      %s131 = sadd.s32 %s130, 1
      %s132 = scalar_select %p129, %s130, %s131
      %p135 = pneg %p129
      %p136 = scmp.eq.s32.totalorder %s17, 3
      %p137 = por %p135, %p136
      %p138 = scmp.ne.s32.totalorder %s130, %s133
      %p139 = scmp.eq.s32.totalorder %s17, 0
      %p140 = por %p138, %p139
      %p141 = scmp.ne.s32.totalorder %s130, %s133
      %p142 = scmp.eq.s32.totalorder %s22, 3
      %p143 = por %p141, %p142
      %p144 = scmp.ne.s32.totalorder %s133, %s134
      %p145 = scmp.eq.s32.totalorder %s22, 0
      %p146 = por %p144, %p145
      %p147 = scmp.ne.s32.totalorder %s133, %s134
      %p148 = scmp.eq.s32.totalorder %s23, 3
      %p149 = por %p147, %p148
      %p151 = scmp.ne.s32.totalorder %s134, %s150
      %p152 = scmp.eq.s32.totalorder %s23, 0
      %p153 = por %p151, %p152
      %p154 = scmp.le.s32.totalorder 1, %s17
      %p155 = scmp.lt.s32.totalorder %s17, 5
      %p156 = pnand %p154, %p155
      %p157 = pneg %p156
      // Predicated region
      $region9: #{tpu_custom_call.1} parent=5 // pred_check
        _
      $region10: #{tpu_custom_call.1} parent=5 // pred_check_branch
        %159 = sbr.rel (%p156) target = $region12
      $region11: #{tpu_custom_call.1} parent=5 // pred_region
        %s160 = ssub.s32 %s17, 1
        // Predicated region
        $region13: #{tpu_custom_call.1} parent=11 // pred_check
          %p161 = pneg %p78
        $region14: #{tpu_custom_call.1} parent=11 // pred_check_branch
          %163 = sbr.rel (%p161) target = $region16
        $region15: #{tpu_custom_call.1} parent=11 // pred_region
          %s165 = ssub.s32 2048, 2048
          %166 = vsyncadd [#allocation7], %s165
          %s167 = sshll.u32 [#allocation6], 4
          %s168 = int_to_ptr.vmem [resolvable:$true] %s167
          %173 = dma.hbm_to_vmem [thread:$0]  %s1, 2048, %s168, [#allocation7], 64, 64, 4
        $region16: #{tpu_custom_call.1} parent=11 // pred_fallthru
          _
        // Predicated region
        $region17: #{tpu_custom_call.1} parent=11 // pred_check
          %p174 = pneg %p99
        $region18: #{tpu_custom_call.1} parent=11 // pred_check_branch
          %176 = sbr.rel (%p174) target = $region20
        $region19: #{tpu_custom_call.1} parent=11 // pred_region
          _
        $region20: #{tpu_custom_call.1} parent=11 // pred_fallthru
          _
        // Predicated region
        $region21: #{tpu_custom_call.1} parent=11 // pred_check
          %p177 = pneg %p120
        $region22: #{tpu_custom_call.1} parent=11 // pred_check_branch
          %179 = sbr.rel (%p177) target = $region24
        $region23: #{tpu_custom_call.1} parent=11 // pred_region
          %s181 = ssub.s32 1024, 1024
          %182 = vsyncadd [#allocation7], %s181
          %s183 = sshll.u32 [#allocation8], 4
          %s184 = int_to_ptr.vmem [resolvable:$true] %s183
          %189 = dma.hbm_to_vmem [thread:$0]  %s3, 1024, %s184, [#allocation7], 64, 64, 4
        $region24: #{tpu_custom_call.1} parent=11 // pred_fallthru
          _
      $region12: #{tpu_custom_call.1} parent=5 // pred_fallthru
        _
      %p190 = scmp.lt.s32.totalorder %s17, 4
      // Predicated region
      $region25: #{tpu_custom_call.1} parent=5 // pred_check
        %p191 = pneg %p190
      $region26: #{tpu_custom_call.1} parent=5 // pred_check_branch
        %193 = sbr.rel (%p191) target = $region28
      $region27: #{tpu_custom_call.1} parent=5 // pred_region
        // Predicated region
        $region29: #{tpu_custom_call.1} parent=27 // pred_check
          %p194 = pneg %p51
        $region30: #{tpu_custom_call.1} parent=27 // pred_check_branch
          %196 = sbr.rel (%p194) target = $region32
        $region31: #{tpu_custom_call.1} parent=27 // pred_region
          %s197 = sand.u32 %s41, 1
          %s198 = scalar_lea.sflag [#allocation4], %s197
          %s199 = sand.u32 %s41, 1
          %s200 = smul.addr %s199, 64
          %s201 = scalar_lea.vmem [#allocation3], %s200
          %s202 = smul.u32 16, %s24
          %s204 = ssub.s32 1024, 1024
          %205 = vsyncadd %s198, %s204
          %s206 = smul.addr %s202, 2
          %s207 = sadd.s32 %s25, %s206
          %s208 = smul.addr %s207, 64
          %s209 = scalar_lea.hbm %s0, %s208
          %s210 = sshll.u32 %s201, 4
          %s211 = int_to_ptr.vmem [resolvable:$true] %s210
          %216 = dma.hbm_to_vmem [thread:$0]  %s209, 1024, %s211, %s198, 128, 64, 4
        $region32: #{tpu_custom_call.1} parent=27 // pred_fallthru
          _
      $region28: #{tpu_custom_call.1} parent=5 // pred_fallthru
        _
      %p217 = scmp.le.s32.totalorder 1, %s17
      %p218 = scmp.lt.s32.totalorder %s17, 5
      %p219 = pnand %p217, %p218
      %p220 = pneg %p219
      // Predicated region
      $region33: #{tpu_custom_call.1} parent=5 // pred_check
        _
      $region34: #{tpu_custom_call.1} parent=5 // pred_check_branch
        %222 = sbr.rel (%p219) target = $region36
      $region35: #{tpu_custom_call.1} parent=5 // pred_region
        %s223 = ssub.s32 %s17, 1
        %s224 = sand.u32 %s44, 1
        %s225 = scalar_lea.sflag [#allocation4], %s224
        %s226 = sand.u32 %s44, 1
        %s227 = smul.addr %s226, 64
        %s228 = scalar_lea.vmem [#allocation3], %s227
        // Predicated region
        $region37: #{tpu_custom_call.1} parent=35 // pred_check
          %p229 = pneg %p57
        $region38: #{tpu_custom_call.1} parent=35 // pred_check_branch
          %231 = sbr.rel (%p229) target = $region40
        $region39: #{tpu_custom_call.1} parent=35 // pred_region
          %232 = dma.done %s225, 1024
        $region40: #{tpu_custom_call.1} parent=35 // pred_fallthru
          _
        // Predicated region
        $region41: #{tpu_custom_call.1} parent=35 // pred_check
          %p233 = pneg %p78
        $region42: #{tpu_custom_call.1} parent=35 // pred_check_branch
          %235 = sbr.rel (%p233) target = $region44
        $region43: #{tpu_custom_call.1} parent=35 // pred_region
          %236 = dma.done [#allocation7], 2048
        $region44: #{tpu_custom_call.1} parent=35 // pred_fallthru
          _
        // Predicated region
        $region45: #{tpu_custom_call.1} parent=35 // pred_check
          %p237 = pneg %p120
        $region46: #{tpu_custom_call.1} parent=35 // pred_check_branch
          %239 = sbr.rel (%p237) target = $region48
        $region47: #{tpu_custom_call.1} parent=35 // pred_region
          %240 = dma.done [#allocation7], 1024
        $region48: #{tpu_custom_call.1} parent=35 // pred_fallthru
          _
        %s241 = sand.u32 %s44, 1
        %s242 = scalar_lea.sflag [#allocation4], %s241
        %s243 = sand.u32 %s44, 1
        %s244 = smul.addr %s243, 64
        %s245 = scalar_lea.vmem [#allocation3], %s244
        %p246 = pneg %p57
        %p247 = pneg %p54
        %p248 = pneg %p78
        %p249 = pneg %p75
        %p250 = pneg %p99
        %p251 = pneg %p96
        %p252 = pneg %p120
        %p253 = pneg %p117
        %p254 = pneg %p146
        %p255 = pneg %p143
        %s256 = sand.u32 %s133, 1
        %s257 = scalar_lea.sflag [#allocation5], %s256
        %s258 = sand.u32 %s133, 1
        %s259 = smul.addr %s258, 64
        %s260 = scalar_lea.vmem [#allocation9], %s259
        %s261 = smul.u32 16, %s26
        %s262 = smul.u32 16, %s26
        %p264 = scmp.eq.s32.totalorder %s27, 0
        // Predicated region
        $region49: #{tpu_custom_call.1} parent=35 // pred_check
          %p265 = pneg %p264
        $region50: #{tpu_custom_call.1} parent=35 // pred_check_branch
          %267 = sbr.rel (%p265) target = $region52
        $region51: #{tpu_custom_call.1} parent=35 // pred_region
          %268 = vst [vmem:[#allocation2] sm:$0xff] 0.0
          %269 = vst [vmem:[#allocation2 + $0x8] sm:$0xff] 0.0
          %270 = vst [vmem:[#allocation2 + $0x10] sm:$0xff] 0.0
          %271 = vst [vmem:[#allocation2 + $0x18] sm:$0xff] 0.0
          %272 = vst [vmem:[#allocation2 + $0x20] sm:$0xff] 0.0
          %273 = vst [vmem:[#allocation2 + $0x28] sm:$0xff] 0.0
          %274 = vst [vmem:[#allocation2 + $0x30] sm:$0xff] 0.0
          %275 = vst [vmem:[#allocation2 + $0x38] sm:$0xff] 0.0
          %276 = vst [vmem:[#allocation2 + $0x40] sm:$0xff] 0.0
          %277 = vst [vmem:[#allocation2 + $0x48] sm:$0xff] 0.0
          %278 = vst [vmem:[#allocation2 + $0x50] sm:$0xff] 0.0
          %279 = vst [vmem:[#allocation2 + $0x58] sm:$0xff] 0.0
          %280 = vst [vmem:[#allocation2 + $0x60] sm:$0xff] 0.0
          %281 = vst [vmem:[#allocation2 + $0x68] sm:$0xff] 0.0
          %282 = vst [vmem:[#allocation2 + $0x70] sm:$0xff] 0.0
          %283 = vst [vmem:[#allocation2 + $0x78] sm:$0xff] 0.0
        $region52: #{tpu_custom_call.1} parent=35 // pred_fallthru
          _
        %s284 = smul.u32 %s27, 128
        %v285 = vld [vmem:[#allocation2] sm:$0xff]
        %v286 = vld [vmem:[#allocation2 + $0x8] sm:$0xff]
        %v287 = vld [vmem:[#allocation2 + $0x10] sm:$0xff]
        %v288 = vld [vmem:[#allocation2 + $0x18] sm:$0xff]
        %v289 = vld [vmem:[#allocation2 + $0x20] sm:$0xff]
        %v290 = vld [vmem:[#allocation2 + $0x28] sm:$0xff]
        %v291 = vld [vmem:[#allocation2 + $0x30] sm:$0xff]
        %v292 = vld [vmem:[#allocation2 + $0x38] sm:$0xff]
        %v293 = vld [vmem:[#allocation2 + $0x40] sm:$0xff]
        %v294 = vld [vmem:[#allocation2 + $0x48] sm:$0xff]
        %v295 = vld [vmem:[#allocation2 + $0x50] sm:$0xff]
        %v296 = vld [vmem:[#allocation2 + $0x58] sm:$0xff]
        %v297 = vld [vmem:[#allocation2 + $0x60] sm:$0xff]
        %v298 = vld [vmem:[#allocation2 + $0x68] sm:$0xff]
        %v299 = vld [vmem:[#allocation2 + $0x70] sm:$0xff]
        %v300 = vld [vmem:[#allocation2 + $0x78] sm:$0xff]
        %v301 = vld [vmem:[%s228] sm:$0xf]
        %v302 = vld [vmem:[%s228 + $0x4] sm:$0xf]
        %v303 = vld [vmem:[%s228 + $0x8] sm:$0xf]
        %v304 = vld [vmem:[%s228 + $0xc] sm:$0xf]
        %v305 = vld [vmem:[%s228 + $0x10] sm:$0xf]
        %v306 = vld [vmem:[%s228 + $0x14] sm:$0xf]
        %v307 = vld [vmem:[%s228 + $0x18] sm:$0xf]
        %v308 = vld [vmem:[%s228 + $0x1c] sm:$0xf]
        %v309 = vld [vmem:[%s228 + $0x20] sm:$0xf]
        %v310 = vld [vmem:[%s228 + $0x24] sm:$0xf]
        %v311 = vld [vmem:[%s228 + $0x28] sm:$0xf]
        %v312 = vld [vmem:[%s228 + $0x2c] sm:$0xf]
        %v313 = vld [vmem:[%s228 + $0x30] sm:$0xf]
        %v314 = vld [vmem:[%s228 + $0x34] sm:$0xf]
        %v315 = vld [vmem:[%s228 + $0x38] sm:$0xf]
        %v316 = vld [vmem:[%s228 + $0x3c] sm:$0xf]
        %s317 = sshra.s32 %s284, 3
        %s318 = sand.u32 %s284, 7
        %s319 = smul.addr %s317, 4
        %s320 = scalar_lea.vmem [#allocation6], %s319
        %v321 = vld [vmem:[%s320] sm:$0xf]
        %v322 = vld [vmem:[%s320 + $0x4] sm:$0xf]
        %v323 = vld [vmem:[%s320 + $0x8] sm:$0xf]
        %v324 = vld [vmem:[%s320 + $0xc] sm:$0xf]
        %v325 = vld [vmem:[%s320 + $0x10] sm:$0xf]
        %v326 = vld [vmem:[%s320 + $0x14] sm:$0xf]
        %v327 = vld [vmem:[%s320 + $0x18] sm:$0xf]
        %v328 = vld [vmem:[%s320 + $0x1c] sm:$0xf]
        %v329 = vld [vmem:[%s320 + $0x20] sm:$0xf]
        %v330 = vld [vmem:[%s320 + $0x24] sm:$0xf]
        %v331 = vld [vmem:[%s320 + $0x28] sm:$0xf]
        %v332 = vld [vmem:[%s320 + $0x2c] sm:$0xf]
        %v333 = vld [vmem:[%s320 + $0x30] sm:$0xf]
        %v334 = vld [vmem:[%s320 + $0x34] sm:$0xf]
        %v335 = vld [vmem:[%s320 + $0x38] sm:$0xf]
        %v336 = vld [vmem:[%s320 + $0x3c] sm:$0xf]
        %v353 = vunpack.c.l.b16 %v301
        %v354 = vunpack.c.l.b16 %v302
        %v355 = vunpack.c.l.b16 %v303
        %v356 = vunpack.c.l.b16 %v304
        %v357 = vunpack.c.l.b16 %v305
        %v358 = vunpack.c.l.b16 %v306
        %v359 = vunpack.c.l.b16 %v307
        %v360 = vunpack.c.l.b16 %v308
        %v361 = vunpack.c.l.b16 %v309
        %v362 = vunpack.c.l.b16 %v310
        %v363 = vunpack.c.l.b16 %v311
        %v364 = vunpack.c.l.b16 %v312
        %v365 = vunpack.c.l.b16 %v313
        %v366 = vunpack.c.l.b16 %v314
        %v367 = vunpack.c.l.b16 %v315
        %v368 = vunpack.c.l.b16 %v316
        %v369 = vpack.c.b16 %v354, %v353
        %v370 = vpack.c.b16 %v356, %v355
        %v371 = vpack.c.b16 %v358, %v357
        %v372 = vpack.c.b16 %v360, %v359
        %v373 = vpack.c.b16 %v362, %v361
        %v374 = vpack.c.b16 %v364, %v363
        %v375 = vpack.c.b16 %v366, %v365
        %v376 = vpack.c.b16 %v368, %v367
        %v401 = vunpack.c.l.b16 %v321
        %v402 = vunpack.c.l.b16 %v322
        %v403 = vunpack.c.l.b16 %v323
        %v404 = vunpack.c.l.b16 %v324
        %v405 = vunpack.c.l.b16 %v325
        %v406 = vunpack.c.l.b16 %v326
        %v407 = vunpack.c.l.b16 %v327
        %v408 = vunpack.c.l.b16 %v328
        %v409 = vunpack.c.l.b16 %v329
        %v410 = vunpack.c.l.b16 %v330
        %v411 = vunpack.c.l.b16 %v331
        %v412 = vunpack.c.l.b16 %v332
        %v413 = vunpack.c.l.b16 %v333
        %v414 = vunpack.c.l.b16 %v334
        %v415 = vunpack.c.l.b16 %v335
        %v416 = vunpack.c.l.b16 %v336
        %v417 = vpack.c.b16 %v402, %v401
        %v418 = vpack.c.b16 %v404, %v403
        %v419 = vpack.c.b16 %v406, %v405
        %v420 = vpack.c.b16 %v408, %v407
        %v421 = vpack.c.b16 %v410, %v409
        %v422 = vpack.c.b16 %v412, %v411
        %v423 = vpack.c.b16 %v414, %v413
        %v424 = vpack.c.b16 %v416, %v415
        %433 = vmatprep.subr.bf16.mxu0 0
        %434 = vmatpush1.bf16.msra.mxu0 %v424
        %435 = vmatprep.subr.bf16.mxu0 0
        %436 = vmatpush1.bf16.msra.mxu0 %v423
        %437 = vmatprep.subr.bf16.mxu0 0
        %438 = vmatpush1.bf16.msra.mxu0 %v422
        %439 = vmatprep.subr.bf16.mxu0 0
        %440 = vmatpush1.bf16.msra.mxu0 %v421
        %441 = vmatprep.subr.bf16.mxu0 0
        %442 = vmatpush1.bf16.msra.mxu0 %v420
        %443 = vmatprep.subr.bf16.mxu0 0
        %444 = vmatpush1.bf16.msra.mxu0 %v419
        %445 = vmatprep.subr.bf16.mxu0 0
        %446 = vmatpush1.bf16.msra.mxu0 %v418
        %447 = vmatprep.subr.bf16.mxu0 0
        %448 = vmatpush1.bf16.msra.mxu0 %v417
        %449 = vmatprep.subr.bf16.mxu0 0
        %450 = vmatpush2.bf16.msra.mxu0 0
        %451 = vmatprep.subr.bf16.mxu0 0
        %452 = vmatpush2.bf16.msra.mxu0 0
        %453 = vmatprep.subr.bf16.mxu0 0
        %454 = vmatpush2.bf16.msra.mxu0 0
        %455 = vmatprep.subr.bf16.mxu0 0
        %456 = vmatpush2.bf16.msra.mxu0 0
        %457 = vmatprep.subr.bf16.mxu0 0
        %458 = vmatpush2.bf16.msra.mxu0 0
        %459 = vmatprep.subr.bf16.mxu0 0
        %460 = vmatpush2.bf16.msra.mxu0 0
        %461 = vmatprep.subr.bf16.mxu0 0
        %462 = vmatpush2.bf16.msra.mxu0 0
        %463 = vmatprep.subr.bf16.mxu0 0
        %464 = vmatpush2.bf16.msra.mxu0 0
        %465 = vmatprep.mubr.bf16.mxu0 0
        %466 = vmatmul.mubr.bf16.gmra.mxu0 %v369
        %v467 = vpop.f32.mrf.mxu0
        %v468 = vadd.f32 0.0, %v467
        %v469 = vpop.f32.mrf.mxu0
        %v470 = vpop.f32.mrf.mxu0
        %v471 = vadd.f32 0.0, %v470
        %v472 = vpop.f32.mrf.mxu0
        %473 = vmatprep.mubr.bf16.mxu0 0
        %474 = vmatmul.mubr.bf16.gmra.mxu0 %v370
        %v475 = vpop.f32.mrf.mxu0
        %v476 = vadd.f32 0.0, %v475
        %v477 = vpop.f32.mrf.mxu0
        %v478 = vpop.f32.mrf.mxu0
        %v479 = vadd.f32 0.0, %v478
        %v480 = vpop.f32.mrf.mxu0
        %481 = vmatprep.mubr.bf16.mxu0 0
        %482 = vmatmul.mubr.bf16.gmra.mxu0 %v371
        %v483 = vpop.f32.mrf.mxu0
        %v484 = vadd.f32 0.0, %v483
        %v485 = vpop.f32.mrf.mxu0
        %v486 = vpop.f32.mrf.mxu0
        %v487 = vadd.f32 0.0, %v486
        %v488 = vpop.f32.mrf.mxu0
        %489 = vmatprep.mubr.bf16.mxu0 0
        %490 = vmatmul.mubr.bf16.gmra.mxu0 %v372
        %v491 = vpop.f32.mrf.mxu0
        %v492 = vadd.f32 0.0, %v491
        %v493 = vpop.f32.mrf.mxu0
        %v494 = vpop.f32.mrf.mxu0
        %v495 = vadd.f32 0.0, %v494
        %v496 = vpop.f32.mrf.mxu0
        %497 = vmatprep.mubr.bf16.mxu0 0
        %498 = vmatmul.mubr.bf16.gmra.mxu0 %v373
        %v499 = vpop.f32.mrf.mxu0
        %v500 = vadd.f32 0.0, %v499
        %v501 = vpop.f32.mrf.mxu0
        %v502 = vpop.f32.mrf.mxu0
        %v503 = vadd.f32 0.0, %v502
        %v504 = vpop.f32.mrf.mxu0
        %505 = vmatprep.mubr.bf16.mxu0 0
        %506 = vmatmul.mubr.bf16.gmra.mxu0 %v374
        %v507 = vpop.f32.mrf.mxu0
        %v508 = vadd.f32 0.0, %v507
        %v509 = vpop.f32.mrf.mxu0
        %v510 = vpop.f32.mrf.mxu0
        %v511 = vadd.f32 0.0, %v510
        %v512 = vpop.f32.mrf.mxu0
        %513 = vmatprep.mubr.bf16.mxu0 0
        %514 = vmatmul.mubr.bf16.gmra.mxu0 %v375
        %v515 = vpop.f32.mrf.mxu0
        %v516 = vadd.f32 0.0, %v515
        %v517 = vpop.f32.mrf.mxu0
        %v518 = vpop.f32.mrf.mxu0
        %v519 = vadd.f32 0.0, %v518
        %v520 = vpop.f32.mrf.mxu0
        %521 = vmatprep.mubr.bf16.mxu0 0
        %522 = vmatmul.mubr.bf16.gmra.mxu0 %v376
        %v523 = vpop.f32.mrf.mxu0
        %v524 = vadd.f32 0.0, %v523
        %v525 = vpop.f32.mrf.mxu0
        %v526 = vpop.f32.mrf.mxu0
        %v527 = vadd.f32 0.0, %v526
        %v528 = vpop.f32.mrf.mxu0
        %529 = vdwg.mxu0
        %v530 = vadd.f32 %v285, %v468
        %v531 = vadd.f32 %v286, %v471
        %v532 = vadd.f32 %v287, %v476
        %v533 = vadd.f32 %v288, %v479
        %v534 = vadd.f32 %v289, %v484
        %v535 = vadd.f32 %v290, %v487
        %v536 = vadd.f32 %v291, %v492
        %v537 = vadd.f32 %v292, %v495
        %v538 = vadd.f32 %v293, %v500
        %v539 = vadd.f32 %v294, %v503
        %v540 = vadd.f32 %v295, %v508
        %v541 = vadd.f32 %v296, %v511
        %v542 = vadd.f32 %v297, %v516
        %v543 = vadd.f32 %v298, %v519
        %v544 = vadd.f32 %v299, %v524
        %v545 = vadd.f32 %v300, %v527
        %546 = vst [vmem:[#allocation2] sm:$0xff] %v530
        %547 = vst [vmem:[#allocation2 + $0x8] sm:$0xff] %v531
        %548 = vst [vmem:[#allocation2 + $0x10] sm:$0xff] %v532
        %549 = vst [vmem:[#allocation2 + $0x18] sm:$0xff] %v533
        %550 = vst [vmem:[#allocation2 + $0x20] sm:$0xff] %v534
        %551 = vst [vmem:[#allocation2 + $0x28] sm:$0xff] %v535
        %552 = vst [vmem:[#allocation2 + $0x30] sm:$0xff] %v536
        %553 = vst [vmem:[#allocation2 + $0x38] sm:$0xff] %v537
        %554 = vst [vmem:[#allocation2 + $0x40] sm:$0xff] %v538
        %555 = vst [vmem:[#allocation2 + $0x48] sm:$0xff] %v539
        %556 = vst [vmem:[#allocation2 + $0x50] sm:$0xff] %v540
        %557 = vst [vmem:[#allocation2 + $0x58] sm:$0xff] %v541
        %558 = vst [vmem:[#allocation2 + $0x60] sm:$0xff] %v542
        %559 = vst [vmem:[#allocation2 + $0x68] sm:$0xff] %v543
        %560 = vst [vmem:[#allocation2 + $0x70] sm:$0xff] %v544
        %561 = vst [vmem:[#allocation2 + $0x78] sm:$0xff] %v545
        %p562 = scmp.eq.s32.totalorder %s27, 1
        // Predicated region
        $region53: #{tpu_custom_call.1} parent=35 // pred_check
          %p563 = pneg %p562
        $region54: #{tpu_custom_call.1} parent=35 // pred_check_branch
          %565 = sbr.rel (%p563) target = $region56
        $region55: #{tpu_custom_call.1} parent=35 // pred_region
          %v566 = vld [vmem:[#allocation2] sm:$0xff]
          %v567 = vld [vmem:[#allocation2 + $0x8] sm:$0xff]
          %v568 = vld [vmem:[#allocation2 + $0x10] sm:$0xff]
          %v569 = vld [vmem:[#allocation2 + $0x18] sm:$0xff]
          %v570 = vld [vmem:[#allocation2 + $0x20] sm:$0xff]
          %v571 = vld [vmem:[#allocation2 + $0x28] sm:$0xff]
          %v572 = vld [vmem:[#allocation2 + $0x30] sm:$0xff]
          %v573 = vld [vmem:[#allocation2 + $0x38] sm:$0xff]
          %v574 = vld [vmem:[#allocation2 + $0x40] sm:$0xff]
          %v575 = vld [vmem:[#allocation2 + $0x48] sm:$0xff]
          %v576 = vld [vmem:[#allocation2 + $0x50] sm:$0xff]
          %v577 = vld [vmem:[#allocation2 + $0x58] sm:$0xff]
          %v578 = vld [vmem:[#allocation2 + $0x60] sm:$0xff]
          %v579 = vld [vmem:[#allocation2 + $0x68] sm:$0xff]
          %v580 = vld [vmem:[#allocation2 + $0x70] sm:$0xff]
          %v581 = vld [vmem:[#allocation2 + $0x78] sm:$0xff]
          %v582 = vld [vmem:[%s2] sm:$0x1]
          %v584 = vlaneseq
          %v585 = vshrl.u32 %v584, 7
          %v586 = vsub.s32 0, %v585
          %v587 = vrot.slane %v582, %v586
          %v589 = vadd.f32 %v566, %v587
          %v590 = vadd.f32 %v567, %v587
          %v591 = vadd.f32 %v568, %v587
          %v592 = vadd.f32 %v569, %v587
          %v593 = vadd.f32 %v570, %v587
          %v594 = vadd.f32 %v571, %v587
          %v595 = vadd.f32 %v572, %v587
          %v596 = vadd.f32 %v573, %v587
          %v597 = vadd.f32 %v574, %v587
          %v598 = vadd.f32 %v575, %v587
          %v599 = vadd.f32 %v576, %v587
          %v600 = vadd.f32 %v577, %v587
          %v601 = vadd.f32 %v578, %v587
          %v602 = vadd.f32 %v579, %v587
          %v603 = vadd.f32 %v580, %v587
          %v604 = vadd.f32 %v581, %v587
          %v605 = vmax.f32 %v589, 0.0
          %v606 = vmax.f32 %v590, 0.0
          %v607 = vmax.f32 %v591, 0.0
          %v608 = vmax.f32 %v592, 0.0
          %v609 = vmax.f32 %v593, 0.0
          %v610 = vmax.f32 %v594, 0.0
          %v611 = vmax.f32 %v595, 0.0
          %v612 = vmax.f32 %v596, 0.0
          %v613 = vmax.f32 %v597, 0.0
          %v614 = vmax.f32 %v598, 0.0
          %v615 = vmax.f32 %v599, 0.0
          %v616 = vmax.f32 %v600, 0.0
          %v617 = vmax.f32 %v601, 0.0
          %v618 = vmax.f32 %v602, 0.0
          %v619 = vmax.f32 %v603, 0.0
          %v620 = vmax.f32 %v604, 0.0
          %v621 = vpack.c.bf16 %v606, %v605
          %v622 = vpack.c.bf16 %v608, %v607
          %v623 = vpack.c.bf16 %v610, %v609
          %v624 = vpack.c.bf16 %v612, %v611
          %v625 = vpack.c.bf16 %v614, %v613
          %v626 = vpack.c.bf16 %v616, %v615
          %v627 = vpack.c.bf16 %v618, %v617
          %v628 = vpack.c.bf16 %v620, %v619
          %v629 = vld [vmem:[#allocation8] sm:$0xf]
          %v630 = vld [vmem:[#allocation8 + $0x4] sm:$0xf]
          %v631 = vld [vmem:[#allocation8 + $0x8] sm:$0xf]
          %v632 = vld [vmem:[#allocation8 + $0xc] sm:$0xf]
          %v633 = vld [vmem:[#allocation8 + $0x10] sm:$0xf]
          %v634 = vld [vmem:[#allocation8 + $0x14] sm:$0xf]
          %v635 = vld [vmem:[#allocation8 + $0x18] sm:$0xf]
          %v636 = vld [vmem:[#allocation8 + $0x1c] sm:$0xf]
          %v637 = vld [vmem:[#allocation8 + $0x20] sm:$0xf]
          %v638 = vld [vmem:[#allocation8 + $0x24] sm:$0xf]
          %v639 = vld [vmem:[#allocation8 + $0x28] sm:$0xf]
          %v640 = vld [vmem:[#allocation8 + $0x2c] sm:$0xf]
          %v641 = vld [vmem:[#allocation8 + $0x30] sm:$0xf]
          %v642 = vld [vmem:[#allocation8 + $0x34] sm:$0xf]
          %v643 = vld [vmem:[#allocation8 + $0x38] sm:$0xf]
          %v644 = vld [vmem:[#allocation8 + $0x3c] sm:$0xf]
          %v661 = vunpack.c.l.b16 %v629
          %v662 = vunpack.c.l.b16 %v630
          %v663 = vunpack.c.l.b16 %v631
          %v664 = vunpack.c.l.b16 %v632
          %v665 = vunpack.c.l.b16 %v633
          %v666 = vunpack.c.l.b16 %v634
          %v667 = vunpack.c.l.b16 %v635
          %v668 = vunpack.c.l.b16 %v636
          %v669 = vunpack.c.l.b16 %v637
          %v670 = vunpack.c.l.b16 %v638
          %v671 = vunpack.c.l.b16 %v639
          %v672 = vunpack.c.l.b16 %v640
          %v673 = vunpack.c.l.b16 %v641
          %v674 = vunpack.c.l.b16 %v642
          %v675 = vunpack.c.l.b16 %v643
          %v676 = vunpack.c.l.b16 %v644
          %v677 = vpack.c.b16 %v662, %v661
          %v678 = vpack.c.b16 %v664, %v663
          %v679 = vpack.c.b16 %v666, %v665
          %v680 = vpack.c.b16 %v668, %v667
          %v681 = vpack.c.b16 %v670, %v669
          %v682 = vpack.c.b16 %v672, %v671
          %v683 = vpack.c.b16 %v674, %v673
          %v684 = vpack.c.b16 %v676, %v675
          %693 = vmatprep.subr.bf16.mxu0 0
          %694 = vmatpush1.bf16.msra.mxu0 %v684
          %695 = vmatprep.subr.bf16.mxu0 0
          %696 = vmatpush1.bf16.msra.mxu0 %v683
          %697 = vmatprep.subr.bf16.mxu0 0
          %698 = vmatpush1.bf16.msra.mxu0 %v682
          %699 = vmatprep.subr.bf16.mxu0 0
          %700 = vmatpush1.bf16.msra.mxu0 %v681
          %701 = vmatprep.subr.bf16.mxu0 0
          %702 = vmatpush1.bf16.msra.mxu0 %v680
          %703 = vmatprep.subr.bf16.mxu0 0
          %704 = vmatpush1.bf16.msra.mxu0 %v679
          %705 = vmatprep.subr.bf16.mxu0 0
          %706 = vmatpush1.bf16.msra.mxu0 %v678
          %707 = vmatprep.subr.bf16.mxu0 0
          %708 = vmatpush1.bf16.msra.mxu0 %v677
          %709 = vmatprep.subr.bf16.mxu0 0
          %710 = vmatpush2.bf16.msra.mxu0 0
          %711 = vmatprep.subr.bf16.mxu0 0
          %712 = vmatpush2.bf16.msra.mxu0 0
          %713 = vmatprep.subr.bf16.mxu0 0
          %714 = vmatpush2.bf16.msra.mxu0 0
          %715 = vmatprep.subr.bf16.mxu0 0
          %716 = vmatpush2.bf16.msra.mxu0 0
          %717 = vmatprep.subr.bf16.mxu0 0
          %718 = vmatpush2.bf16.msra.mxu0 0
          %719 = vmatprep.subr.bf16.mxu0 0
          %720 = vmatpush2.bf16.msra.mxu0 0
          %721 = vmatprep.subr.bf16.mxu0 0
          %722 = vmatpush2.bf16.msra.mxu0 0
          %723 = vmatprep.subr.bf16.mxu0 0
          %724 = vmatpush2.bf16.msra.mxu0 0
          %725 = vmatprep.mubr.bf16.mxu0 0
          %726 = vmatmul.mubr.bf16.gmra.mxu0 %v621
          %v727 = vpop.f32.mrf.mxu0
          %v728 = vadd.f32 0.0, %v727
          %v729 = vpop.f32.mrf.mxu0
          %v730 = vpop.f32.mrf.mxu0
          %v731 = vadd.f32 0.0, %v730
          %v732 = vpop.f32.mrf.mxu0
          %733 = vmatprep.mubr.bf16.mxu0 0
          %734 = vmatmul.mubr.bf16.gmra.mxu0 %v622
          %v735 = vpop.f32.mrf.mxu0
          %v736 = vadd.f32 0.0, %v735
          %v737 = vpop.f32.mrf.mxu0
          %v738 = vpop.f32.mrf.mxu0
          %v739 = vadd.f32 0.0, %v738
          %v740 = vpop.f32.mrf.mxu0
          %741 = vmatprep.mubr.bf16.mxu0 0
          %742 = vmatmul.mubr.bf16.gmra.mxu0 %v623
          %v743 = vpop.f32.mrf.mxu0
          %v744 = vadd.f32 0.0, %v743
          %v745 = vpop.f32.mrf.mxu0
          %v746 = vpop.f32.mrf.mxu0
          %v747 = vadd.f32 0.0, %v746
          %v748 = vpop.f32.mrf.mxu0
          %749 = vmatprep.mubr.bf16.mxu0 0
          %750 = vmatmul.mubr.bf16.gmra.mxu0 %v624
          %v751 = vpop.f32.mrf.mxu0
          %v752 = vadd.f32 0.0, %v751
          %v753 = vpop.f32.mrf.mxu0
          %v754 = vpop.f32.mrf.mxu0
          %v755 = vadd.f32 0.0, %v754
          %v756 = vpop.f32.mrf.mxu0
          %757 = vmatprep.mubr.bf16.mxu0 0
          %758 = vmatmul.mubr.bf16.gmra.mxu0 %v625
          %v759 = vpop.f32.mrf.mxu0
          %v760 = vadd.f32 0.0, %v759
          %v761 = vpop.f32.mrf.mxu0
          %v762 = vpop.f32.mrf.mxu0
          %v763 = vadd.f32 0.0, %v762
          %v764 = vpop.f32.mrf.mxu0
          %765 = vmatprep.mubr.bf16.mxu0 0
          %766 = vmatmul.mubr.bf16.gmra.mxu0 %v626
          %v767 = vpop.f32.mrf.mxu0
          %v768 = vadd.f32 0.0, %v767
          %v769 = vpop.f32.mrf.mxu0
          %v770 = vpop.f32.mrf.mxu0
          %v771 = vadd.f32 0.0, %v770
          %v772 = vpop.f32.mrf.mxu0
          %773 = vmatprep.mubr.bf16.mxu0 0
          %774 = vmatmul.mubr.bf16.gmra.mxu0 %v627
          %v775 = vpop.f32.mrf.mxu0
          %v776 = vadd.f32 0.0, %v775
          %v777 = vpop.f32.mrf.mxu0
          %v778 = vpop.f32.mrf.mxu0
          %v779 = vadd.f32 0.0, %v778
          %v780 = vpop.f32.mrf.mxu0
          %781 = vmatprep.mubr.bf16.mxu0 0
          %782 = vmatmul.mubr.bf16.gmra.mxu0 %v628
          %v783 = vpop.f32.mrf.mxu0
          %v784 = vadd.f32 0.0, %v783
          %v785 = vpop.f32.mrf.mxu0
          %v786 = vpop.f32.mrf.mxu0
          %v787 = vadd.f32 0.0, %v786
          %v788 = vpop.f32.mrf.mxu0
          %789 = vdwg.mxu0
          %v790 = vpack.c.bf16 %v731, %v728
          %v791 = vpack.c.bf16 %v739, %v736
          %v792 = vpack.c.bf16 %v747, %v744
          %v793 = vpack.c.bf16 %v755, %v752
          %v794 = vpack.c.bf16 %v763, %v760
          %v795 = vpack.c.bf16 %v771, %v768
          %v796 = vpack.c.bf16 %v779, %v776
          %v797 = vpack.c.bf16 %v787, %v784
          %v806 = vunpack.c.l.b16 %v790
          %v807 = vunpack.c.h.b16 %v790
          %v808 = vunpack.c.l.b16 %v791
          %v809 = vunpack.c.h.b16 %v791
          %v810 = vunpack.c.l.b16 %v792
          %v811 = vunpack.c.h.b16 %v792
          %v812 = vunpack.c.l.b16 %v793
          %v813 = vunpack.c.h.b16 %v793
          %v814 = vunpack.c.l.b16 %v794
          %v815 = vunpack.c.h.b16 %v794
          %v816 = vunpack.c.l.b16 %v795
          %v817 = vunpack.c.h.b16 %v795
          %v818 = vunpack.c.l.b16 %v796
          %v819 = vunpack.c.h.b16 %v796
          %v820 = vunpack.c.l.b16 %v797
          %v821 = vunpack.c.h.b16 %v797
          %v822 = vpack.c.b16 %v806, %v806
          %v823 = vpack.c.b16 %v807, %v807
          %v824 = vpack.c.b16 %v808, %v808
          %v825 = vpack.c.b16 %v809, %v809
          %v826 = vpack.c.b16 %v810, %v810
          %v827 = vpack.c.b16 %v811, %v811
          %v828 = vpack.c.b16 %v812, %v812
          %v829 = vpack.c.b16 %v813, %v813
          %v830 = vpack.c.b16 %v814, %v814
          %v831 = vpack.c.b16 %v815, %v815
          %v832 = vpack.c.b16 %v816, %v816
          %v833 = vpack.c.b16 %v817, %v817
          %v834 = vpack.c.b16 %v818, %v818
          %v835 = vpack.c.b16 %v819, %v819
          %v836 = vpack.c.b16 %v820, %v820
          %v837 = vpack.c.b16 %v821, %v821
          %854 = vst [vmem:[%s260] sm:$0xf] %v822
          %855 = vst [vmem:[%s260 + $0x4] sm:$0xf] %v823
          %856 = vst [vmem:[%s260 + $0x8] sm:$0xf] %v824
          %857 = vst [vmem:[%s260 + $0xc] sm:$0xf] %v825
          %858 = vst [vmem:[%s260 + $0x10] sm:$0xf] %v826
          %859 = vst [vmem:[%s260 + $0x14] sm:$0xf] %v827
          %860 = vst [vmem:[%s260 + $0x18] sm:$0xf] %v828
          %861 = vst [vmem:[%s260 + $0x1c] sm:$0xf] %v829
          %862 = vst [vmem:[%s260 + $0x20] sm:$0xf] %v830
          %863 = vst [vmem:[%s260 + $0x24] sm:$0xf] %v831
          %864 = vst [vmem:[%s260 + $0x28] sm:$0xf] %v832
          %865 = vst [vmem:[%s260 + $0x2c] sm:$0xf] %v833
          %866 = vst [vmem:[%s260 + $0x30] sm:$0xf] %v834
          %867 = vst [vmem:[%s260 + $0x34] sm:$0xf] %v835
          %868 = vst [vmem:[%s260 + $0x38] sm:$0xf] %v836
          %869 = vst [vmem:[%s260 + $0x3c] sm:$0xf] %v837
        $region56: #{tpu_custom_call.1} parent=35 // pred_fallthru
          _
        %s870 = sand.u32 %s133, 1
        %s871 = scalar_lea.sflag [#allocation5], %s870
        %s872 = sand.u32 %s133, 1
        %s873 = smul.addr %s872, 64
        %s874 = scalar_lea.vmem [#allocation9], %s873
        // Predicated region
        $region57: #{tpu_custom_call.1} parent=35 // pred_check
          %p875 = pneg %p143
        $region58: #{tpu_custom_call.1} parent=35 // pred_check_branch
          %877 = sbr.rel (%p875) target = $region60
        $region59: #{tpu_custom_call.1} parent=35 // pred_region
          %s878 = smul.u32 16, %s26
          %s880 = ssub.s32 1024, 1024
          %881 = vsyncadd %s871, %s880
          %s882 = smul.addr %s878, 64
          %s883 = scalar_lea.hbm %s4, %s882
          %s884 = sshll.u32 %s874, 4
          %s885 = int_to_ptr.vmem [resolvable:$true] %s884
          %890 = dma.vmem_to_hbm [thread:$0]  %s885, 1024, %s883, %s871, 64, 64, 4
        $region60: #{tpu_custom_call.1} parent=35 // pred_fallthru
          _
      $region36: #{tpu_custom_call.1} parent=5 // pred_fallthru
        _
      %p891 = scmp.le.s32.totalorder 2, %s17
      // Predicated region
      $region61: #{tpu_custom_call.1} parent=5 // pred_check
        %p892 = pneg %p891
      $region62: #{tpu_custom_call.1} parent=5 // pred_check_branch
        %894 = sbr.rel (%p892) target = $region64
      $region63: #{tpu_custom_call.1} parent=5 // pred_region
        %s895 = ssub.s32 %s17, 2
        // Predicated region
        $region65: #{tpu_custom_call.1} parent=63 // pred_check
          %p896 = pneg %p149
        $region66: #{tpu_custom_call.1} parent=63 // pred_check_branch
          %898 = sbr.rel (%p896) target = $region68
        $region67: #{tpu_custom_call.1} parent=63 // pred_region
          %s899 = sand.u32 %s134, 1
          %s900 = scalar_lea.sflag [#allocation5], %s899
          %s901 = sand.u32 %s134, 1
          %s902 = smul.addr %s901, 64
          %s903 = scalar_lea.vmem [#allocation9], %s902
          %904 = dma.done %s900, 1024
        $region68: #{tpu_custom_call.1} parent=63 // pred_fallthru
          _
      $region64: #{tpu_custom_call.1} parent=5 // pred_fallthru
        _
    $region6: #{tpu_custom_call.1} parent=1 // loop_footer
      %s21 = sadd.s32 1, %s17
    $region7: #{tpu_custom_call.1} parent=1 // loop_footer_branch
      %16 = sbr.rel target = $region3
    $region8: #{tpu_custom_call.1} parent=1 // loop_exit
      _
    %905 = vsyncpa [#allocation4], 1
    %s906 = scalar_lea.sflag [#allocation4], 1
    %907 = vsyncpa %s906, 1
    %908 = vsyncpa [#allocation7], 1
    %909 = vsyncpa [#allocation5], 1
    %s910 = scalar_lea.sflag [#allocation5], 1
    %911 = vsyncpa %s910, 1

</llo_original>
